<compile_context>
chip_gen: v7x
topology: tpu7x:2x2x1
jax: 0.10.0
libtpu: 0.0.40
codegen_flags: <defaults>
</compile_context>

<pallas_src>
import jax
import jax.numpy as jnp
import numpy as np
from jax.experimental import pallas as pl
from jax.experimental.pallas import tpu as pltpu

_LANE = 512            # pixels per lane row (multiple of 128 -> lane-dense vregs)
_MAX_BLOCK_ROWS = 64   # 64 * 512 = 32768 pixels (~128 KiB f32) per grid step
_PAD_SENTINEL = -1.0   # padded ground pixels match neither ==1.0 nor ==0.0


def _bce_partial_kernel(x_ref, y_ref, out_ref):
    """One grid step: reduce a (block_rows, LANE) pixel tile to 4 partials."""
    x = x_ref[...].astype(jnp.float32)      # logits  (BR, LANE); bf16 upcast in-kernel
    y = y_ref[...]                          # labels  (BR, LANE) f32

    pos = y == 1.0                          # pixels in the "label 1" term
    neg = y == 0.0                          # pixels in the "label 0" term

    # Numerically stable softplus:
    #   -log(sigmoid(x))     = softplus(-x) = max(-x, 0) + log(1 + exp(-|x|))
    #   -log(1 - sigmoid(x)) = softplus( x) = max( x, 0) + log(1 + exp(-|x|))
    log1pexp = jnp.log(1.0 + jnp.exp(-jnp.abs(x)))          # EUP work, lane-dense
    loss_pos = jnp.maximum(-x, 0.0) + log1pexp              # -log(sigmoid(x))
    loss_neg = jnp.maximum(x, 0.0) + log1pexp               # -log(1 - sigmoid(x))
    # torch.nn.BCELoss clamps log terms at -100 -> per-element loss <= 100
    loss_pos = jnp.minimum(loss_pos, 100.0)
    loss_neg = jnp.minimum(loss_neg, 100.0)

    sum_pos = jnp.sum(jnp.where(pos, loss_pos, 0.0), keepdims=True)  # (1, 1)
    cnt_pos = jnp.sum(jnp.where(pos, 1.0, 0.0), keepdims=True)
    sum_neg = jnp.sum(jnp.where(neg, loss_neg, 0.0), keepdims=True)
    cnt_neg = jnp.sum(jnp.where(neg, 1.0, 0.0), keepdims=True)

    row = jnp.concatenate([sum_pos, cnt_pos, sum_neg, cnt_neg], axis=-1)  # (1, 4)
    out_ref[...] = row.reshape(1, 1, 4)


def _bce_sums(x, y):
    """x, y: flat (P,) logits / labels. Returns f32[4] = (sum+, cnt+, sum-, cnt-)."""
    P = x.shape[0]
    rows = -(-P // _LANE)
    rows = ((rows + 7) // 8) * 8                       # sublane multiple of 8
    block_rows = min(_MAX_BLOCK_ROWS, rows)
    rows = ((rows + block_rows - 1) // block_rows) * block_rows
    p_pad = rows * _LANE
    if p_pad != P:                                     # ragged tail only
        x = jnp.pad(x, (0, p_pad - P))
        y = jnp.pad(y, (0, p_pad - P), constant_values=_PAD_SENTINEL)
    x2 = x.reshape(rows, _LANE)
    y2 = y.reshape(rows, _LANE)
    num_blocks = rows // block_rows

    parts = pl.pallas_call(
        _bce_partial_kernel,
        out_shape=jax.ShapeDtypeStruct((num_blocks, 1, 4), jnp.float32),
        grid_spec=pltpu.PrefetchScalarGridSpec(
            num_scalar_prefetch=0,
            grid=(num_blocks,),
            in_specs=[
                pl.BlockSpec((block_rows, _LANE), lambda i: (i, 0)),
                pl.BlockSpec((block_rows, _LANE), lambda i: (i, 0)),
            ],
            out_specs=pl.BlockSpec((1, 1, 4), lambda i: (i, 0, 0)),
        ),
        compiler_params=pltpu.CompilerParams(
            dimension_semantics=("parallel",)),        # independent blocks -> 2 TCs on v7x
    )(x2, y2)

    return jnp.sum(parts.reshape(num_blocks, 4), axis=0)


def cross_entropy_loss(predict, ground):
    """Pallas equivalent of CrossEntropyLoss.forward.

    predict: (N, C, H, W) logits; channel 0 is used.
    ground:  (N, G, H, W); channel 0 holds binary labels {0.0, 1.0}.
    Returns scalar f32: BCE(sigmoid(x)|g==1, 1) + 0.5 * BCE(sigmoid(x)|g==0, 0).
    """
    x = predict[:, 0, :, :].reshape(-1)                      # (P,) logits (keep input dtype)
    y = ground[:, 0, :, :].astype(jnp.float32).reshape(-1)   # (P,) labels
    s = _bce_sums(x, y)
    # If a class is entirely absent its count is 0 -> NaN, matching torch
    # BCELoss(mean) over an empty selection.
    return s[0] / s[1] + 0.5 * s[2] / s[3]


def _reference(predict, ground):
    """Pure-JAX mirror of the PyTorch module (sigmoid -> BCELoss with log clamp)."""
    x = predict[:, 0, :, :].astype(jnp.float32)
    y = ground[:, 0, :, :].astype(jnp.float32)
    p = 1.0 / (1.0 + jnp.exp(-x))
    pos = y == 1.0
    neg = y == 0.0
    log_p = jnp.maximum(jnp.log(p), -100.0)
    log_1mp = jnp.maximum(jnp.log(1.0 - p), -100.0)
    loss1 = -jnp.sum(jnp.where(pos, log_p, 0.0)) / jnp.sum(pos).astype(jnp.float32)
    loss2 = -jnp.sum(jnp.where(neg, log_1mp, 0.0)) / jnp.sum(neg).astype(jnp.float32)
    return loss1 + 0.5 * loss2


if __name__ == "__main__":
    key = jax.random.PRNGKey(0)
    k1, k2 = jax.random.split(key)

    N, C, H, W = 2, 4, 16, 16
    predict = jax.random.normal(k1, (N, C, H, W), dtype=jnp.float32)
    # ground: (N, 2, H, W); channel 0 holds binary {0.0, 1.0} labels
    ground = jax.random.bernoulli(k2, 0.5, (N, 2, H, W)).astype(jnp.float32)

    loss = jax.block_until_ready(cross_entropy_loss(predict, ground))
    ref = jax.block_until_ready(_reference(predict, ground))
    np.testing.assert_allclose(np.array(loss), np.array(ref),
                               rtol=1e-5, atol=1e-5)
    print("KERNEL_OK")
</pallas_src>

<mosaic_0001>
module attributes {stable_mosaic.version = 11 : i64} {
  func.func @_bce_partial_kernel(%arg0: i32, %arg1: memref<8x512xf32, #tpu.memory_space<vmem>>, %arg2: memref<8x512xf32, #tpu.memory_space<vmem>>, %arg3: memref<1x1x4xf32, #tpu.memory_space<vmem>>) attributes {dimension_semantics = [#tpu.dimension_semantics<parallel>], iteration_bounds = array<i64: 1>, scalar_prefetch = 0 : i64, scratch_operands = 0 : i64, tpu.core_type = #tpu.core_type<tc>, window_params = [{transform_indices = @transform_0, window_bounds = array<i64: 8, 512>}, {transform_indices = @transform_1, window_bounds = array<i64: 8, 512>}, {transform_indices = @transform_2, window_bounds = array<i64: 1, 1, 4>}]} {
    %c0 = arith.constant 0 : index
    %c0_0 = arith.constant 0 : index
    %0 = vector.load %arg1[%c0, %c0_0] : memref<8x512xf32, #tpu.memory_space<vmem>>, vector<8x512xf32>
    %c0_1 = arith.constant 0 : index
    %c0_2 = arith.constant 0 : index
    %1 = vector.load %arg2[%c0_1, %c0_2] : memref<8x512xf32, #tpu.memory_space<vmem>>, vector<8x512xf32>
    %cst = arith.constant 1.000000e+00 : f32
    %2 = vector.broadcast %cst : f32 to vector<8x512xf32>
    %3 = arith.cmpf oeq, %1, %2 : vector<8x512xf32>
    %cst_3 = arith.constant 0.000000e+00 : f32
    %4 = vector.broadcast %cst_3 : f32 to vector<8x512xf32>
    %5 = arith.cmpf oeq, %1, %4 : vector<8x512xf32>
    %6 = math.absf %0 : vector<8x512xf32>
    %cst_4 = arith.constant 0.000000e+00 : f32
    %7 = vector.broadcast %cst_4 : f32 to vector<8x512xf32>
    %8 = arith.subf %7, %6 : vector<8x512xf32>
    %9 = math.exp %8 : vector<8x512xf32>
    %cst_5 = arith.constant 1.000000e+00 : f32
    %10 = vector.broadcast %cst_5 : f32 to vector<8x512xf32>
    %11 = arith.addf %10, %9 : vector<8x512xf32>
    %12 = math.log %11 : vector<8x512xf32>
    %cst_6 = arith.constant 0.000000e+00 : f32
    %13 = vector.broadcast %cst_6 : f32 to vector<8x512xf32>
    %14 = arith.subf %13, %0 : vector<8x512xf32>
    %cst_7 = arith.constant 0.000000e+00 : f32
    %15 = vector.broadcast %cst_7 : f32 to vector<8x512xf32>
    %16 = arith.maximumf %14, %15 : vector<8x512xf32>
    %17 = arith.addf %16, %12 : vector<8x512xf32>
    %cst_8 = arith.constant 0.000000e+00 : f32
    %18 = vector.broadcast %cst_8 : f32 to vector<8x512xf32>
    %19 = arith.maximumf %0, %18 : vector<8x512xf32>
    %20 = arith.addf %19, %12 : vector<8x512xf32>
    %cst_9 = arith.constant 1.000000e+02 : f32
    %21 = vector.broadcast %cst_9 : f32 to vector<8x512xf32>
    %22 = arith.minimumf %17, %21 : vector<8x512xf32>
    %cst_10 = arith.constant 1.000000e+02 : f32
    %23 = vector.broadcast %cst_10 : f32 to vector<8x512xf32>
    %24 = arith.minimumf %20, %23 : vector<8x512xf32>
    %cst_11 = arith.constant 0.000000e+00 : f32
    %25 = vector.broadcast %cst_11 : f32 to vector<8x512xf32>
    %26 = arith.select %3, %22, %25 : vector<8x512xi1>, vector<8x512xf32>
    %27 = vector.shape_cast %26 : vector<8x512xf32> to vector<1x8x512xf32>
    %cst_12 = arith.constant dense<0.000000e+00> : vector<1xf32>
    %28 = vector.multi_reduction <add>, %27, %cst_12 [1, 2] : vector<1x8x512xf32> to vector<1xf32>
    %29 = vector.shape_cast %28 : vector<1xf32> to vector<1x1x1xf32>
    %30 = vector.extract %29[0, 0, 0] : f32 from vector<1x1x1xf32>
    %31 = vector.broadcast %30 : f32 to vector<1x1xf32>
    %cst_13 = arith.constant 1.000000e+00 : f32
    %cst_14 = arith.constant 0.000000e+00 : f32
    %32 = vector.broadcast %cst_13 : f32 to vector<8x512xf32>
    %33 = vector.broadcast %cst_14 : f32 to vector<8x512xf32>
    %34 = arith.select %3, %32, %33 : vector<8x512xi1>, vector<8x512xf32>
    %35 = vector.shape_cast %34 : vector<8x512xf32> to vector<1x8x512xf32>
    %cst_15 = arith.constant dense<0.000000e+00> : vector<1xf32>
    %36 = vector.multi_reduction <add>, %35, %cst_15 [1, 2] : vector<1x8x512xf32> to vector<1xf32>
    %37 = vector.shape_cast %36 : vector<1xf32> to vector<1x1x1xf32>
    %38 = vector.extract %37[0, 0, 0] : f32 from vector<1x1x1xf32>
    %39 = vector.broadcast %38 : f32 to vector<1x1xf32>
    %cst_16 = arith.constant 0.000000e+00 : f32
    %40 = vector.broadcast %cst_16 : f32 to vector<8x512xf32>
    %41 = arith.select %5, %24, %40 : vector<8x512xi1>, vector<8x512xf32>
    %42 = vector.shape_cast %41 : vector<8x512xf32> to vector<1x8x512xf32>
    %cst_17 = arith.constant dense<0.000000e+00> : vector<1xf32>
    %43 = vector.multi_reduction <add>, %42, %cst_17 [1, 2] : vector<1x8x512xf32> to vector<1xf32>
    %44 = vector.shape_cast %43 : vector<1xf32> to vector<1x1x1xf32>
    %45 = vector.extract %44[0, 0, 0] : f32 from vector<1x1x1xf32>
    %46 = vector.broadcast %45 : f32 to vector<1x1xf32>
    %cst_18 = arith.constant 1.000000e+00 : f32
    %cst_19 = arith.constant 0.000000e+00 : f32
    %47 = vector.broadcast %cst_18 : f32 to vector<8x512xf32>
    %48 = vector.broadcast %cst_19 : f32 to vector<8x512xf32>
    %49 = arith.select %5, %47, %48 : vector<8x512xi1>, vector<8x512xf32>
    %50 = vector.shape_cast %49 : vector<8x512xf32> to vector<1x8x512xf32>
    %cst_20 = arith.constant dense<0.000000e+00> : vector<1xf32>
    %51 = vector.multi_reduction <add>, %50, %cst_20 [1, 2] : vector<1x8x512xf32> to vector<1xf32>
    %52 = vector.shape_cast %51 : vector<1xf32> to vector<1x1x1xf32>
    %53 = vector.extract %52[0, 0, 0] : f32 from vector<1x1x1xf32>
    %54 = vector.broadcast %53 : f32 to vector<1x1xf32>
    %55 = tpu.concatenate %31, %39, %46, %54 in 1 : vector<1x1xf32>, vector<1x1xf32>, vector<1x1xf32>, vector<1x1xf32> -> vector<1x4xf32>
    %56 = vector.shape_cast %55 : vector<1x4xf32> to vector<1x1x4xf32>
    %c0_21 = arith.constant 0 : index
    %c0_22 = arith.constant 0 : index
    %c0_23 = arith.constant 0 : index
    %57 = vector.load %arg3[%c0_21, %c0_22, %c0_23] : memref<1x1x4xf32, #tpu.memory_space<vmem>>, vector<1x1x4xf32>
    tpu.vector_store %arg3[%c0_21, %c0_22, %c0_23], %56 {strides = array<i32>} : memref<1x1x4xf32, #tpu.memory_space<vmem>>, vector<1x1x4xf32>,
    return
  }
  func.func @transform_0(%arg0: i32) -> (i32, i32) {
    %c0_i32 = arith.constant 0 : i32
    %c0_i32_0 = arith.constant 0 : i32
    return %arg0, %c0_i32 : i32, i32
  }
  func.func @transform_1(%arg0: i32) -> (i32, i32) {
    %c0_i32 = arith.constant 0 : i32
    %c0_i32_0 = arith.constant 0 : i32
    return %arg0, %c0_i32 : i32, i32
  }
  func.func @transform_2(%arg0: i32) -> (i32, i32, i32) {
    %c0_i32 = arith.constant 0 : i32
    %c0_i32_0 = arith.constant 0 : i32
    %c0_i32_1 = arith.constant 0 : i32
    return %arg0, %c0_i32, %c0_i32_0 : i32, i32, i32
  }
}

</mosaic_0001>

<llo_original>
// kernel: tpu_custom_call.1
$region0: #{tpu_custom_call.1}
  #allocation0 [shape = 'u32[]', space=smem, size = 0x4, offset = 0x4, fixed_abs, tag = 'smem constant byte address 0x4 - core index']
  #allocation1 [shape = 'u32[144,128]{1,0:T(1,128)}', space=vmem, size = 0x12000, scoped, tag = 'internal scratch']
  %s0 = inlined_call_operand.hbm [shape: f32[8,512], index: 0, kind: input, shape index: {}]
  %s1 = inlined_call_operand.hbm [shape: f32[8,512], index: 1, kind: input, shape index: {}]
  %s2 = inlined_call_operand.hbm [shape: f32[1,1,4], index: 2, kind: output, shape index: {}]
  %s3 = sld [smem:[#allocation0]]
  $region26: #{tpu_custom_call.1} parent=0
    _
  %s5 = ssub.s32 1, %s3
  %s6 = scalar_select 0, %s5, %s3
  $region1: #{tpu_custom_call.1} parent=0
    #allocation2 [shape = 'u8[16384]{0}', space=vmem, size = 0x4000, scoped, tag = 'input window, operand 0, single buffered']
    #allocation3 [shape = 's32[1]{0}', space=sflag, size = 0x4, scoped, tag = 'scoped memory for tpu_custom_call.1']
    #allocation4 [shape = 's32[1]{0}', space=sflag, size = 0x4, scoped, tag = 'scoped memory for tpu_custom_call.1']
    #allocation5 [shape = 'u8[16384]{0}', space=vmem, size = 0x4000, scoped, tag = 'input window, operand 1, single buffered']
    #allocation6 [shape = 's32[1]{0}', space=sflag, size = 0x4, scoped, tag = 'scoped memory for tpu_custom_call.1']
    #allocation7 [shape = 'u8[512]{0}', space=vmem, size = 0x400, scoped, tag = 'output window, operand 0, single buffered']
    %7 = vsyncpa [#allocation3], 0
    %8 = vsyncpa [#allocation6], 0
    %9 = vsyncpa [#allocation4], 0
    // Predicated region
    $region2: #{tpu_custom_call.1} parent=1 // pred_check
      _
    $region3: #{tpu_custom_call.1} parent=1 // pred_check_branch
      %11 = sbr.rel (0) target = $region5
    $region4: #{tpu_custom_call.1} parent=1 // pred_region
      %s13 = ssub.s32 512, 512
      %14 = vsyncadd [#allocation3], %s13
      %s16 = sshll.u32 [#allocation2], 4
      %s17 = int_to_ptr.vmem [resolvable:$true] %s16
      %19 = dma.hbm_to_vmem [thread:$0]  %s0, 512, %s17, [#allocation3]
    $region5: #{tpu_custom_call.1} parent=1 // pred_fallthru
      _
    // Predicated region
    $region6: #{tpu_custom_call.1} parent=1 // pred_check
      _
    $region7: #{tpu_custom_call.1} parent=1 // pred_check_branch
      %21 = sbr.rel (0) target = $region9
    $region8: #{tpu_custom_call.1} parent=1 // pred_region
      %s23 = ssub.s32 512, 512
      %24 = vsyncadd [#allocation6], %s23
      %s26 = sshll.u32 [#allocation5], 4
      %s27 = int_to_ptr.vmem [resolvable:$true] %s26
      %29 = dma.hbm_to_vmem [thread:$0]  %s1, 512, %s27, [#allocation6]
    $region9: #{tpu_custom_call.1} parent=1 // pred_fallthru
      _
    // Predicated region
    $region10: #{tpu_custom_call.1} parent=1 // pred_check
      _
    $region11: #{tpu_custom_call.1} parent=1 // pred_check_branch
      %31 = sbr.rel (0) target = $region13
    $region12: #{tpu_custom_call.1} parent=1 // pred_region
      %32 = dma.done [#allocation3], 512
    $region13: #{tpu_custom_call.1} parent=1 // pred_fallthru
      _
    // Predicated region
    $region14: #{tpu_custom_call.1} parent=1 // pred_check
      _
    $region15: #{tpu_custom_call.1} parent=1 // pred_check_branch
      %34 = sbr.rel (0) target = $region17
    $region16: #{tpu_custom_call.1} parent=1 // pred_region
      %35 = dma.done [#allocation6], 512
    $region17: #{tpu_custom_call.1} parent=1 // pred_fallthru
      _
    %v36 = vld [vmem:[#allocation2] sm:$0xff]
    %v37 = vld [vmem:[#allocation2 + $0x8] sm:$0xff]
    %v38 = vld [vmem:[#allocation2 + $0x10] sm:$0xff]
    %v39 = vld [vmem:[#allocation2 + $0x18] sm:$0xff]
    %v40 = vld [vmem:[#allocation5] sm:$0xff]
    %v41 = vld [vmem:[#allocation5 + $0x8] sm:$0xff]
    %v42 = vld [vmem:[#allocation5 + $0x10] sm:$0xff]
    %v43 = vld [vmem:[#allocation5 + $0x18] sm:$0xff]
    %vm44 = vcmp.eq.f32.partialorder %v40, 1.0
    %vm45 = vcmp.eq.f32.partialorder %v41, 1.0
    %vm46 = vcmp.eq.f32.partialorder %v42, 1.0
    %vm47 = vcmp.eq.f32.partialorder %v43, 1.0
    %vm48 = vcmp.eq.f32.partialorder %v40, 0.0
    %vm49 = vcmp.eq.f32.partialorder %v41, 0.0
    %vm50 = vcmp.eq.f32.partialorder %v42, 0.0
    %vm51 = vcmp.eq.f32.partialorder %v43, 0.0
    %v52 = vand.u32 2147483647, %v36
    %v53 = vand.u32 2147483647, %v37
    %v54 = vand.u32 2147483647, %v38
    %v55 = vand.u32 2147483647, %v39
    %v56 = vsub.f32 0.0, %v52
    %v57 = vsub.f32 0.0, %v53
    %v58 = vsub.f32 0.0, %v54
    %v59 = vsub.f32 0.0, %v55
    %v60 = vmul.f32 %v56, 1.442695
    %v61 = vpow.pop %v60
    %v62 = vmul.f32 %v57, 1.442695
    %v63 = vpow.pop %v62
    %v64 = vmul.f32 %v58, 1.442695
    %v65 = vpow.pop %v64
    %v66 = vmul.f32 %v59, 1.442695
    %v67 = vpow.pop %v66
    %v68 = vadd.f32 %v61, 1.0
    %v69 = vadd.f32 %v63, 1.0
    %v70 = vadd.f32 %v65, 1.0
    %v71 = vadd.f32 %v67, 1.0
    %v72 = vlog2.pop %v68
    %v73 = vmul.f32 %v72, 0.6931472
    %v74 = vlog2.pop %v69
    %v75 = vmul.f32 %v74, 0.6931472
    %v76 = vlog2.pop %v70
    %v77 = vmul.f32 %v76, 0.6931472
    %v78 = vlog2.pop %v71
    %v79 = vmul.f32 %v78, 0.6931472
    %v80 = vsub.f32 0.0, %v36
    %v81 = vsub.f32 0.0, %v37
    %v82 = vsub.f32 0.0, %v38
    %v83 = vsub.f32 0.0, %v39
    %v84 = vmax.f32 %v80, 0.0
    %v85 = vmax.f32 %v81, 0.0
    %v86 = vmax.f32 %v82, 0.0
    %v87 = vmax.f32 %v83, 0.0
    %v88 = vadd.f32 %v84, %v73
    %v89 = vadd.f32 %v85, %v75
    %v90 = vadd.f32 %v86, %v77
    %v91 = vadd.f32 %v87, %v79
    %v92 = vmax.f32 %v36, 0.0
    %v93 = vmax.f32 %v37, 0.0
    %v94 = vmax.f32 %v38, 0.0
    %v95 = vmax.f32 %v39, 0.0
    %v96 = vadd.f32 %v92, %v73
    %v97 = vadd.f32 %v93, %v75
    %v98 = vadd.f32 %v94, %v77
    %v99 = vadd.f32 %v95, %v79
    %v100 = vmin.f32 %v88, 100.0
    %v101 = vmin.f32 %v89, 100.0
    %v102 = vmin.f32 %v90, 100.0
    %v103 = vmin.f32 %v91, 100.0
    %v104 = vmin.f32 %v96, 100.0
    %v105 = vmin.f32 %v97, 100.0
    %v106 = vmin.f32 %v98, 100.0
    %v107 = vmin.f32 %v99, 100.0
    %v108 = vsel %vm44, %v100, 0.0
    %v109 = vsel %vm45, %v101, 0.0
    %v110 = vsel %vm46, %v102, 0.0
    %v111 = vsel %vm47, %v103, 0.0
    %v112 = vadd.f32 %v108, %v109
    %v113 = vadd.f32 %v112, %v110
    %v114 = vadd.f32 %v113, %v111
    %115 = vadd.xlane.f32.xlu0 %v114
    %v116 = vpop.xlane.xlu0 %115
    %v117 = vrot.slane %v116, 4
    %v118 = vadd.f32 %v116, %v117
    %v119 = vrot.slane %v118, 2
    %v120 = vadd.f32 %v118, %v119
    %v121 = vrot.slane %v120, 1
    %v122 = vadd.f32 %v120, %v121
    %s123 = vtos %v122
    %v124 = vstv %s123
    %v125 = vsel %vm44, 1.0, 0.0
    %v126 = vsel %vm45, 1.0, 0.0
    %v127 = vsel %vm46, 1.0, 0.0
    %v128 = vsel %vm47, 1.0, 0.0
    %v129 = vadd.f32 %v125, %v126
    %v130 = vadd.f32 %v129, %v127
    %v131 = vadd.f32 %v130, %v128
    %132 = vadd.xlane.f32.xlu0 %v131
    %v133 = vpop.xlane.xlu0 %132
    %v134 = vrot.slane %v133, 4
    %v135 = vadd.f32 %v133, %v134
    %v136 = vrot.slane %v135, 2
    %v137 = vadd.f32 %v135, %v136
    %v138 = vrot.slane %v137, 1
    %v139 = vadd.f32 %v137, %v138
    %s140 = vtos %v139
    %v141 = vstv %s140
    %v142 = vsel %vm48, %v104, 0.0
    %v143 = vsel %vm49, %v105, 0.0
    %v144 = vsel %vm50, %v106, 0.0
    %v145 = vsel %vm51, %v107, 0.0
    %v146 = vadd.f32 %v142, %v143
    %v147 = vadd.f32 %v146, %v144
    %v148 = vadd.f32 %v147, %v145
    %149 = vadd.xlane.f32.xlu0 %v148
    %v150 = vpop.xlane.xlu0 %149
    %v151 = vrot.slane %v150, 4
    %v152 = vadd.f32 %v150, %v151
    %v153 = vrot.slane %v152, 2
    %v154 = vadd.f32 %v152, %v153
    %v155 = vrot.slane %v154, 1
    %v156 = vadd.f32 %v154, %v155
    %s157 = vtos %v156
    %v158 = vstv %s157
    %v159 = vsel %vm48, 1.0, 0.0
    %v160 = vsel %vm49, 1.0, 0.0
    %v161 = vsel %vm50, 1.0, 0.0
    %v162 = vsel %vm51, 1.0, 0.0
    %v163 = vadd.f32 %v159, %v160
    %v164 = vadd.f32 %v163, %v161
    %v165 = vadd.f32 %v164, %v162
    %166 = vadd.xlane.f32.xlu0 %v165
    %v167 = vpop.xlane.xlu0 %166
    %v168 = vrot.slane %v167, 4
    %v169 = vadd.f32 %v167, %v168
    %v170 = vrot.slane %v169, 2
    %v171 = vadd.f32 %v169, %v170
    %v172 = vrot.slane %v171, 1
    %v173 = vadd.f32 %v171, %v172
    %s174 = vtos %v173
    %v175 = vstv %s174
    %vm176 = vcmask 7168
    %v177 = vsel %vm176, %v124, %v141
    %vm178 = vcmask 15360
    %v179 = vsel %vm178, %v177, %v158
    %vm180 = vcmask 23552
    %v181 = vsel %vm180, %v179, %v175
    %vm182 = vcmask 24576
    %183 = vst.msk [vmem:[#allocation7] sm:$0x1] %vm182, %v181
    // Predicated region
    $region18: #{tpu_custom_call.1} parent=1 // pred_check
      _
    $region19: #{tpu_custom_call.1} parent=1 // pred_check_branch
      %185 = sbr.rel (0) target = $region21
    $region20: #{tpu_custom_call.1} parent=1 // pred_region
      %s187 = ssub.s32 16, 16
      %188 = vsyncadd [#allocation4], %s187
      %s190 = sshll.u32 [#allocation7], 4
      %s191 = int_to_ptr.vmem [resolvable:$true] %s190
      %193 = dma.vmem_to_hbm [thread:$0]  %s191, 16, %s2, [#allocation4]
    $region21: #{tpu_custom_call.1} parent=1 // pred_fallthru
      _
    // Predicated region
    $region22: #{tpu_custom_call.1} parent=1 // pred_check
      _
    $region23: #{tpu_custom_call.1} parent=1 // pred_check_branch
      %195 = sbr.rel (0) target = $region25
    $region24: #{tpu_custom_call.1} parent=1 // pred_region
      %196 = dma.done [#allocation4], 16
    $region25: #{tpu_custom_call.1} parent=1 // pred_fallthru
      _
    %197 = vsyncpa [#allocation3], 1
    %198 = vsyncpa [#allocation6], 1
    %199 = vsyncpa [#allocation4], 1

</llo_original>
